<compile_context>
chip_gen: v6e
topology: v6e:2x2x1
jax: 0.10.0
libtpu: 0.0.40
codegen_flags: <defaults>
</compile_context>

<pallas_src>
import jax
import jax.numpy as jnp
from jax.experimental import pallas as pl
from jax.experimental.pallas import tpu as pltpu

LANE = 128           # lane width (last-dim granule)
BATCH_GRANULE = 16   # bf16 sublane granule (second-to-last dim)


def _round_up(x, m):
    return (x + m - 1) // m * m


def _chip_budget():
    """(vmem_limit_bytes, default_block_batch) per TPU generation."""
    try:
        cap = int(pltpu.get_tpu_info().vmem_capacity_bytes)
    except Exception:
        cap = 64 * 1024 * 1024            # conservative (v7x-sized) fallback
    if cap >= 100 * 1024 * 1024:          # v5e / v6e: 128 MiB physical VMEM
        return 96 * 1024 * 1024, 512
    return 48 * 1024 * 1024, 256          # v7x: 64 MiB per TensorCore


def _sigmoid(h):
    # 0.5*(tanh(0.5*h)+1) == sigmoid(h): one EUP op, keeps the divide off VALU.
    return 0.5 * (jnp.tanh(0.5 * h) + 1.0)


def mlp_kernel(x_ref, w1_ref, b1_ref, w2_ref, b2_ref, w3_ref, b3_ref, o_ref):
    """Fused 3-layer MLP on one batch tile.

    x_ref : [TB, IN_P]   compute dtype (normally bf16)
    wK_ref: [*, *]       padded weights, [in, out] layout (compute dtype)
    bK_ref: [1, *]       f32
    o_ref : [TB, OUT_P]  f32
    """
    cdt = w1_ref.dtype

    h1 = jnp.dot(x_ref[...], w1_ref[...],
                 preferred_element_type=jnp.float32) + b1_ref[...]
    h1 = _sigmoid(h1)

    h2 = jnp.dot(h1.astype(cdt), w2_ref[...],
                 preferred_element_type=jnp.float32) + b2_ref[...]
    h2 = _sigmoid(h2)

    out = jnp.dot(h2.astype(cdt), w3_ref[...],
                  preferred_element_type=jnp.float32) + b3_ref[...]
    o_ref[...] = out.astype(o_ref.dtype)


def prepare_params(params, *, compute_dtype=jnp.bfloat16):
    """One-time lane-padding + cast of weights/biases (hoisted off the
    per-call path)."""
    w1, b1, w2, b2, w3, b3 = (params[k] for k in ("w1", "b1", "w2", "b2", "w3", "b3"))
    n_in, n_hid = w1.shape
    n_out = w3.shape[1]
    in_p, hid_p, out_p = (_round_up(d, LANE) for d in (n_in, n_hid, n_out))

    pad2 = lambda a, r, c: jnp.pad(a, ((0, r - a.shape[0]), (0, c - a.shape[1])))
    prep = dict(
        w1=pad2(w1, in_p, hid_p).astype(compute_dtype),
        w2=pad2(w2, hid_p, hid_p).astype(compute_dtype),
        w3=pad2(w3, hid_p, out_p).astype(compute_dtype),
        b1=pad2(b1, 1, hid_p).astype(jnp.float32),
        b2=pad2(b2, 1, hid_p).astype(jnp.float32),
        b3=pad2(b3, 1, out_p).astype(jnp.float32),
    )
    meta = dict(n_in=n_in, n_hid=n_hid, n_out=n_out,
                in_p=in_p, hid_p=hid_p, out_p=out_p)
    return prep, meta


def mlp_forward(x, prep, meta, *, block_batch=None, vmem_limit_bytes=None):
    """x: [B, n_input] f32. Returns [B, n_output] f32."""
    B, n_in = x.shape
    assert n_in == meta["n_in"]
    in_p, hid_p, out_p = meta["in_p"], meta["hid_p"], meta["out_p"]
    cdt = prep["w1"].dtype

    vlim, bb = _chip_budget()
    block_batch = bb if block_batch is None else block_batch
    vmem_limit_bytes = vlim if vmem_limit_bytes is None else vmem_limit_bytes

    # Pad the batch only to the 16-row granule; the last grid block may be
    # partial (out-of-bounds rows compute garbage that is never written back).
    b_p = _round_up(B, BATCH_GRANULE)
    tb = min(_round_up(block_batch, BATCH_GRANULE), b_p)
    # Give megacore (v7x, 2 TCs) at least two grid steps when the batch allows.
    if pl.cdiv(b_p, tb) < 2 and b_p >= 2 * BATCH_GRANULE:
        tb = _round_up(pl.cdiv(b_p, 2), BATCH_GRANULE)
    grid = (pl.cdiv(b_p, tb),)

    xp = jnp.pad(x, ((0, b_p - B), (0, in_p - n_in))).astype(cdt)

    # Grid-invariant operands stay VMEM-resident across grid steps; single-
    # buffer them once they are big enough for double-buffering to matter.
    w_bytes = sum(prep[k].size * prep[k].dtype.itemsize for k in ("w1", "w2", "w3"))
    if w_bytes > 4 * 1024 * 1024:
        const = lambda a: pl.BlockSpec(a.shape, lambda i: (0, 0),
                                       pipeline_mode=pl.Buffered(1))
    else:
        const = lambda a: pl.BlockSpec(a.shape, lambda i: (0, 0))
    # TODO(synk): for n_hidden large enough that resident weights overflow VMEM
    # (v7x ~4-5k even single-buffered), add a K/N-tiled path with an f32
    # accumulator scratch + pl.when init/finalize instead of failing to fit.

    flops = 2 * b_p * (in_p * hid_p + hid_p * hid_p + hid_p * out_p)
    x_itemsize = jnp.dtype(cdt).itemsize
    bytes_accessed = (xp.size * x_itemsize + w_bytes
                      + (prep["b1"].size + prep["b2"].size + prep["b3"].size) * 4
                      + b_p * out_p * 4)

    out_padded = pl.pallas_call(
        mlp_kernel,
        out_shape=jax.ShapeDtypeStruct((b_p, out_p), jnp.float32),
        grid=grid,
        in_specs=[
            pl.BlockSpec((tb, in_p), lambda i: (i, 0)),   # x: batch-tiled
            const(prep["w1"]), const(prep["b1"]),
            const(prep["w2"]), const(prep["b2"]),
            const(prep["w3"]), const(prep["b3"]),
        ],
        out_specs=pl.BlockSpec((tb, out_p), lambda i: (i, 0)),
        compiler_params=pltpu.CompilerParams(
            dimension_semantics=("parallel",),            # megacore sharding
            vmem_limit_bytes=vmem_limit_bytes,
        ),
        cost_estimate=pl.CostEstimate(
            flops=flops,
            transcendentals=2 * b_p * hid_p,
            bytes_accessed=bytes_accessed,
        ),
    )(xp, prep["w1"], prep["b1"], prep["w2"], prep["b2"], prep["w3"], prep["b3"])

    return out_padded[:B, :meta["n_out"]]


def init_params(key, n_input, n_hidden, n_output):
    """PyTorch nn.Linear init: U(-1/sqrt(fan_in), 1/sqrt(fan_in)).
    Weights stored transposed ([in, out]) relative to torch.nn.Linear."""
    ks = jax.random.split(key, 6)

    def linear(kw, kb, fan_in, fan_out):
        bound = 1.0 / (fan_in ** 0.5)
        w = jax.random.uniform(kw, (fan_in, fan_out), jnp.float32, -bound, bound)
        b = jax.random.uniform(kb, (1, fan_out), jnp.float32, -bound, bound)
        return w, b

    w1, b1 = linear(ks[0], ks[1], n_input, n_hidden)
    w2, b2 = linear(ks[2], ks[3], n_hidden, n_hidden)
    w3, b3 = linear(ks[4], ks[5], n_hidden, n_output)
    return dict(w1=w1, b1=b1, w2=w2, b2=b2, w3=w3, b3=b3)


def reference_forward(x, p, compute_dtype=jnp.bfloat16):
    """Pure-JAX reference. compute_dtype=bf16 matches the kernel's MXU path;
    compute_dtype=f32 is the exact PyTorch-semantics path."""
    f32 = jnp.float32

    def lin(a, w, b):
        return jnp.dot(a.astype(compute_dtype), w.astype(compute_dtype),
                       preferred_element_type=f32) + b

    h1 = jax.nn.sigmoid(lin(x, p["w1"], p["b1"]))
    h2 = jax.nn.sigmoid(lin(h1, p["w2"], p["b2"]))
    return lin(h2, p["w3"], p["b3"])


if __name__ == "__main__":
    key = jax.random.PRNGKey(0)
    k_x, k_p = jax.random.split(key)

    n_input, n_hidden, n_output = 16, 32, 8
    params = init_params(k_p, n_input, n_hidden, n_output)
    prep, meta = prepare_params(params)          # one-time weight prep

    # Case 1: tiny batch (single tile).
    x1 = jax.random.normal(k_x, (8, n_input), jnp.float32)
    out1 = jax.block_until_ready(mlp_forward(x1, prep, meta))
    assert out1.shape == (8, n_output)
    assert jnp.allclose(out1, reference_forward(x1, params, jnp.bfloat16),
                        atol=5e-3, rtol=5e-3), "mismatch vs bf16-path reference"
    assert jnp.allclose(out1, reference_forward(x1, params, jnp.float32),
                        atol=5e-2, rtol=5e-2), "mismatch vs f32 reference"

    # Case 2: batch that is not a tile multiple (exercises the megacore tile
    # split and a partial last grid block).
    x2 = jax.random.normal(jax.random.PRNGKey(1), (40, n_input), jnp.float32)
    out2 = jax.block_until_ready(mlp_forward(x2, prep, meta))
    assert out2.shape == (40, n_output)
    assert jnp.allclose(out2, reference_forward(x2, params, jnp.bfloat16),
                        atol=5e-3, rtol=5e-3), "mismatch vs reference (case 2)"

    print("KERNEL_OK")
</pallas_src>

<mosaic_0001>
module attributes {stable_mosaic.version = 11 : i64} {
  func.func @mlp_kernel(%arg0: i32, %arg1: memref<16x128xbf16, #tpu.memory_space<vmem>>, %arg2: memref<128x128xbf16, #tpu.memory_space<vmem>>, %arg3: memref<1x128xf32, #tpu.memory_space<vmem>>, %arg4: memref<128x128xbf16, #tpu.memory_space<vmem>>, %arg5: memref<1x128xf32, #tpu.memory_space<vmem>>, %arg6: memref<128x128xbf16, #tpu.memory_space<vmem>>, %arg7: memref<1x128xf32, #tpu.memory_space<vmem>>, %arg8: memref<16x128xf32, #tpu.memory_space<vmem>>) attributes {dimension_semantics = [#tpu.dimension_semantics<parallel>], iteration_bounds = array<i64: 1>, scalar_prefetch = 0 : i64, scratch_operands = 0 : i64, tpu.core_type = #tpu.core_type<tc>, window_params = [{transform_indices = @transform_0, window_bounds = array<i64: 16, 128>}, {pipeline_mode = #tpu.pipeline_mode<synchronous>, transform_indices = @transform_1, window_bounds = array<i64: 128, 128>}, {pipeline_mode = #tpu.pipeline_mode<synchronous>, transform_indices = @transform_2, window_bounds = array<i64: 1, 128>}, {pipeline_mode = #tpu.pipeline_mode<synchronous>, transform_indices = @transform_3, window_bounds = array<i64: 128, 128>}, {pipeline_mode = #tpu.pipeline_mode<synchronous>, transform_indices = @transform_4, window_bounds = array<i64: 1, 128>}, {pipeline_mode = #tpu.pipeline_mode<synchronous>, transform_indices = @transform_5, window_bounds = array<i64: 128, 128>}, {pipeline_mode = #tpu.pipeline_mode<synchronous>, transform_indices = @transform_6, window_bounds = array<i64: 1, 128>}, {transform_indices = @transform_7, window_bounds = array<i64: 16, 128>}]} {
    %c0 = arith.constant 0 : index
    %c0_0 = arith.constant 0 : index
    %0 = vector.load %arg1[%c0, %c0_0] : memref<16x128xbf16, #tpu.memory_space<vmem>>, vector<16x128xbf16>
    %c0_1 = arith.constant 0 : index
    %c0_2 = arith.constant 0 : index
    %1 = vector.load %arg2[%c0_1, %c0_2] : memref<128x128xbf16, #tpu.memory_space<vmem>>, vector<128x128xbf16>
    %cst = arith.constant dense<0.000000e+00> : vector<16x128xf32>
    %2 = tpu.matmul %0, %1, %cst {dimension_numbers = #tpu.dot_dimension_numbers<[1], [0], [0], [1], [0, 0, 1, 1], [], []>} : vector<16x128xbf16>, vector<128x128xbf16>, vector<16x128xf32> -> vector<16x128xf32>
    %c0_3 = arith.constant 0 : index
    %c0_4 = arith.constant 0 : index
    %3 = vector.load %arg3[%c0_3, %c0_4] : memref<1x128xf32, #tpu.memory_space<vmem>>, vector<1x128xf32>
    %4 = vector.broadcast %3 : vector<1x128xf32> to vector<16x128xf32>
    %5 = arith.addf %2, %4 : vector<16x128xf32>
    %cst_5 = arith.constant 5.000000e-01 : f32
    %6 = vector.broadcast %cst_5 : f32 to vector<16x128xf32>
    %7 = arith.mulf %6, %5 : vector<16x128xf32>
    %8 = math.tanh %7 : vector<16x128xf32>
    %cst_6 = arith.constant 1.000000e+00 : f32
    %9 = vector.broadcast %cst_6 : f32 to vector<16x128xf32>
    %10 = arith.addf %8, %9 : vector<16x128xf32>
    %cst_7 = arith.constant 5.000000e-01 : f32
    %11 = vector.broadcast %cst_7 : f32 to vector<16x128xf32>
    %12 = arith.mulf %11, %10 : vector<16x128xf32>
    %13 = arith.truncf %12 : vector<16x128xf32> to vector<16x128xbf16>
    %c0_8 = arith.constant 0 : index
    %c0_9 = arith.constant 0 : index
    %14 = vector.load %arg4[%c0_8, %c0_9] : memref<128x128xbf16, #tpu.memory_space<vmem>>, vector<128x128xbf16>
    %cst_10 = arith.constant dense<0.000000e+00> : vector<16x128xf32>
    %15 = tpu.matmul %13, %14, %cst_10 {dimension_numbers = #tpu.dot_dimension_numbers<[1], [0], [0], [1], [0, 0, 1, 1], [], []>} : vector<16x128xbf16>, vector<128x128xbf16>, vector<16x128xf32> -> vector<16x128xf32>
    %c0_11 = arith.constant 0 : index
    %c0_12 = arith.constant 0 : index
    %16 = vector.load %arg5[%c0_11, %c0_12] : memref<1x128xf32, #tpu.memory_space<vmem>>, vector<1x128xf32>
    %17 = vector.broadcast %16 : vector<1x128xf32> to vector<16x128xf32>
    %18 = arith.addf %15, %17 : vector<16x128xf32>
    %cst_13 = arith.constant 5.000000e-01 : f32
    %19 = vector.broadcast %cst_13 : f32 to vector<16x128xf32>
    %20 = arith.mulf %19, %18 : vector<16x128xf32>
    %21 = math.tanh %20 : vector<16x128xf32>
    %cst_14 = arith.constant 1.000000e+00 : f32
    %22 = vector.broadcast %cst_14 : f32 to vector<16x128xf32>
    %23 = arith.addf %21, %22 : vector<16x128xf32>
    %cst_15 = arith.constant 5.000000e-01 : f32
    %24 = vector.broadcast %cst_15 : f32 to vector<16x128xf32>
    %25 = arith.mulf %24, %23 : vector<16x128xf32>
    %26 = arith.truncf %25 : vector<16x128xf32> to vector<16x128xbf16>
    %c0_16 = arith.constant 0 : index
    %c0_17 = arith.constant 0 : index
    %27 = vector.load %arg6[%c0_16, %c0_17] : memref<128x128xbf16, #tpu.memory_space<vmem>>, vector<128x128xbf16>
    %cst_18 = arith.constant dense<0.000000e+00> : vector<16x128xf32>
    %28 = tpu.matmul %26, %27, %cst_18 {dimension_numbers = #tpu.dot_dimension_numbers<[1], [0], [0], [1], [0, 0, 1, 1], [], []>} : vector<16x128xbf16>, vector<128x128xbf16>, vector<16x128xf32> -> vector<16x128xf32>
    %c0_19 = arith.constant 0 : index
    %c0_20 = arith.constant 0 : index
    %29 = vector.load %arg7[%c0_19, %c0_20] : memref<1x128xf32, #tpu.memory_space<vmem>>, vector<1x128xf32>
    %30 = vector.broadcast %29 : vector<1x128xf32> to vector<16x128xf32>
    %31 = arith.addf %28, %30 : vector<16x128xf32>
    %c0_21 = arith.constant 0 : index
    %c0_22 = arith.constant 0 : index
    %32 = vector.load %arg8[%c0_21, %c0_22] : memref<16x128xf32, #tpu.memory_space<vmem>>, vector<16x128xf32>
    tpu.vector_store %arg8[%c0_21, %c0_22], %31 {strides = array<i32>} : memref<16x128xf32, #tpu.memory_space<vmem>>, vector<16x128xf32>,
    return
  }
  func.func @transform_0(%arg0: i32) -> (i32, i32) {
    %c0_i32 = arith.constant 0 : i32
    %c0_i32_0 = arith.constant 0 : i32
    return %arg0, %c0_i32 : i32, i32
  }
  func.func @transform_1(%arg0: i32) -> (i32, i32) {
    %c0_i32 = arith.constant 0 : i32
    %c0_i32_0 = arith.constant 0 : i32
    %c0_i32_1 = arith.constant 0 : i32
    return %c0_i32, %c0_i32_0 : i32, i32
  }
  func.func @transform_2(%arg0: i32) -> (i32, i32) {
    %c0_i32 = arith.constant 0 : i32
    %c0_i32_0 = arith.constant 0 : i32
    %c0_i32_1 = arith.constant 0 : i32
    return %c0_i32, %c0_i32_0 : i32, i32
  }
  func.func @transform_3(%arg0: i32) -> (i32, i32) {
    %c0_i32 = arith.constant 0 : i32
    %c0_i32_0 = arith.constant 0 : i32
    %c0_i32_1 = arith.constant 0 : i32
    return %c0_i32, %c0_i32_0 : i32, i32
  }
  func.func @transform_4(%arg0: i32) -> (i32, i32) {
    %c0_i32 = arith.constant 0 : i32
    %c0_i32_0 = arith.constant 0 : i32
    %c0_i32_1 = arith.constant 0 : i32
    return %c0_i32, %c0_i32_0 : i32, i32
  }
  func.func @transform_5(%arg0: i32) -> (i32, i32) {
    %c0_i32 = arith.constant 0 : i32
    %c0_i32_0 = arith.constant 0 : i32
    %c0_i32_1 = arith.constant 0 : i32
    return %c0_i32, %c0_i32_0 : i32, i32
  }
  func.func @transform_6(%arg0: i32) -> (i32, i32) {
    %c0_i32 = arith.constant 0 : i32
    %c0_i32_0 = arith.constant 0 : i32
    %c0_i32_1 = arith.constant 0 : i32
    return %c0_i32, %c0_i32_0 : i32, i32
  }
  func.func @transform_7(%arg0: i32) -> (i32, i32) {
    %c0_i32 = arith.constant 0 : i32
    %c0_i32_0 = arith.constant 0 : i32
    return %arg0, %c0_i32 : i32, i32
  }
}

</mosaic_0001>

<llo_original>
// kernel: tpu_custom_call.1
$region0: #{tpu_custom_call.1}
  #allocation0 [shape = 'u32[]', space=smem, size = 0x4, offset = 0x4, fixed_abs, tag = 'smem constant byte address 0x4 - core index']
  #allocation1 [shape = 'u32[144,128]{1,0:T(1,128)}', space=vmem, size = 0x12000, scoped, tag = 'internal scratch']
  %s0 = inlined_call_operand.hbm [shape: bf16[16,128], index: 0, kind: input, shape index: {}]
  %s1 = inlined_call_operand.hbm [shape: bf16[128,128], index: 1, kind: input, shape index: {}]
  %s2 = inlined_call_operand.vmem [shape: f32[1,128], index: 2, kind: input, shape index: {}]
  %s3 = inlined_call_operand.hbm [shape: bf16[128,128], index: 3, kind: input, shape index: {}]
  %s4 = inlined_call_operand.vmem [shape: f32[1,128], index: 4, kind: input, shape index: {}]
  %s5 = inlined_call_operand.hbm [shape: bf16[128,128], index: 5, kind: input, shape index: {}]
  %s6 = inlined_call_operand.vmem [shape: f32[1,128], index: 6, kind: input, shape index: {}]
  %s7 = inlined_call_operand.hbm [shape: f32[16,128], index: 7, kind: output, shape index: {}]
  %s8 = sld [smem:[#allocation0]]
  $region54: #{tpu_custom_call.1} parent=0
    _
  %s10 = ssub.s32 1, %s8
  %s11 = scalar_select 0, %s10, %s8
  $region1: #{tpu_custom_call.1} parent=0
    #allocation2 [shape = 'u8[4096]{0}', space=vmem, size = 0x1000, scoped, tag = 'input window, operand 0, single buffered']
    #allocation3 [shape = 's32[1]{0}', space=sflag, size = 0x4, scoped, tag = 'scoped memory for tpu_custom_call.1']
    #allocation4 [shape = 's32[1]{0}', space=sflag, size = 0x4, scoped, tag = 'scoped memory for tpu_custom_call.1']
    #allocation5 [shape = 'u8[32768]{0}', space=vmem, size = 0x8000, scoped, tag = 'input window, operand 1, single buffered']
    #allocation6 [shape = 's32[1]{0}', space=sflag, size = 0x4, scoped, tag = 'scoped memory for tpu_custom_call.1']
    #allocation7 [shape = 'u8[32768]{0}', space=vmem, size = 0x8000, scoped, tag = 'input window, operand 3, single buffered']
    #allocation8 [shape = 'u8[32768]{0}', space=vmem, size = 0x8000, scoped, tag = 'input window, operand 5, single buffered']
    #allocation9 [shape = 's32[1]{0}', space=sflag, size = 0x4, scoped, tag = 'scoped memory for tpu_custom_call.1']
    #allocation10 [shape = 'u8[8192]{0}', space=vmem, size = 0x2000, scoped, tag = 'output window, operand 0, single buffered']
    %12 = vsyncpa [#allocation3], 0
    %13 = vsyncpa [#allocation6], 0
    %14 = vsyncpa [#allocation9], 0
    %15 = vsyncpa [#allocation4], 0
    // Predicated region
    $region2: #{tpu_custom_call.1} parent=1 // pred_check
      _
    $region3: #{tpu_custom_call.1} parent=1 // pred_check_branch
      %17 = sbr.rel (0) target = $region5
    $region4: #{tpu_custom_call.1} parent=1 // pred_region
      %s19 = ssub.s32 128, 128
      %20 = vsyncadd [#allocation3], %s19
      %s21 = sshll.u32 [#allocation2], 4
      %s22 = int_to_ptr.vmem [resolvable:$true] %s21
      %27 = dma.hbm_to_vmem [thread:$0]  %s0, 128, %s22, [#allocation3], 64, 64, 4
    $region5: #{tpu_custom_call.1} parent=1 // pred_fallthru
      _
    // Predicated region
    $region6: #{tpu_custom_call.1} parent=1 // pred_check
      _
    $region7: #{tpu_custom_call.1} parent=1 // pred_check_branch
      %29 = sbr.rel (0) target = $region9
    $region8: #{tpu_custom_call.1} parent=1 // pred_region
      %s31 = ssub.s32 1024, 1024
      %32 = vsyncadd [#allocation6], %s31
      %s33 = sshll.u32 [#allocation5], 4
      %s34 = int_to_ptr.vmem [resolvable:$true] %s33
      %39 = dma.hbm_to_vmem [thread:$0]  %s1, 1024, %s34, [#allocation6], 64, 64, 4
    $region9: #{tpu_custom_call.1} parent=1 // pred_fallthru
      _
    // Predicated region
    $region10: #{tpu_custom_call.1} parent=1 // pred_check
      _
    $region11: #{tpu_custom_call.1} parent=1 // pred_check_branch
      %41 = sbr.rel (0) target = $region13
    $region12: #{tpu_custom_call.1} parent=1 // pred_region
      _
    $region13: #{tpu_custom_call.1} parent=1 // pred_fallthru
      _
    // Predicated region
    $region14: #{tpu_custom_call.1} parent=1 // pred_check
      _
    $region15: #{tpu_custom_call.1} parent=1 // pred_check_branch
      %43 = sbr.rel (0) target = $region17
    $region16: #{tpu_custom_call.1} parent=1 // pred_region
      %s45 = ssub.s32 1024, 1024
      %46 = vsyncadd [#allocation6], %s45
      %s47 = sshll.u32 [#allocation7], 4
      %s48 = int_to_ptr.vmem [resolvable:$true] %s47
      %53 = dma.hbm_to_vmem [thread:$0]  %s3, 1024, %s48, [#allocation6], 64, 64, 4
    $region17: #{tpu_custom_call.1} parent=1 // pred_fallthru
      _
    // Predicated region
    $region18: #{tpu_custom_call.1} parent=1 // pred_check
      _
    $region19: #{tpu_custom_call.1} parent=1 // pred_check_branch
      %55 = sbr.rel (0) target = $region21
    $region20: #{tpu_custom_call.1} parent=1 // pred_region
      _
    $region21: #{tpu_custom_call.1} parent=1 // pred_fallthru
      _
    // Predicated region
    $region22: #{tpu_custom_call.1} parent=1 // pred_check
      _
    $region23: #{tpu_custom_call.1} parent=1 // pred_check_branch
      %57 = sbr.rel (0) target = $region25
    $region24: #{tpu_custom_call.1} parent=1 // pred_region
      %s59 = ssub.s32 1024, 1024
      %60 = vsyncadd [#allocation9], %s59
      %s61 = sshll.u32 [#allocation8], 4
      %s62 = int_to_ptr.vmem [resolvable:$true] %s61
      %67 = dma.hbm_to_vmem [thread:$0]  %s5, 1024, %s62, [#allocation9], 64, 64, 4
    $region25: #{tpu_custom_call.1} parent=1 // pred_fallthru
      _
    // Predicated region
    $region26: #{tpu_custom_call.1} parent=1 // pred_check
      _
    $region27: #{tpu_custom_call.1} parent=1 // pred_check_branch
      %69 = sbr.rel (0) target = $region29
    $region28: #{tpu_custom_call.1} parent=1 // pred_region
      _
    $region29: #{tpu_custom_call.1} parent=1 // pred_fallthru
      _
    // Predicated region
    $region30: #{tpu_custom_call.1} parent=1 // pred_check
      _
    $region31: #{tpu_custom_call.1} parent=1 // pred_check_branch
      %71 = sbr.rel (0) target = $region33
    $region32: #{tpu_custom_call.1} parent=1 // pred_region
      %72 = dma.done [#allocation3], 128
    $region33: #{tpu_custom_call.1} parent=1 // pred_fallthru
      _
    // Predicated region
    $region34: #{tpu_custom_call.1} parent=1 // pred_check
      _
    $region35: #{tpu_custom_call.1} parent=1 // pred_check_branch
      %74 = sbr.rel (0) target = $region37
    $region36: #{tpu_custom_call.1} parent=1 // pred_region
      %75 = dma.done [#allocation6], 1024
    $region37: #{tpu_custom_call.1} parent=1 // pred_fallthru
      _
    // Predicated region
    $region38: #{tpu_custom_call.1} parent=1 // pred_check
      _
    $region39: #{tpu_custom_call.1} parent=1 // pred_check_branch
      %77 = sbr.rel (0) target = $region41
    $region40: #{tpu_custom_call.1} parent=1 // pred_region
      %78 = dma.done [#allocation6], 1024
    $region41: #{tpu_custom_call.1} parent=1 // pred_fallthru
      _
    // Predicated region
    $region42: #{tpu_custom_call.1} parent=1 // pred_check
      _
    $region43: #{tpu_custom_call.1} parent=1 // pred_check_branch
      %80 = sbr.rel (0) target = $region45
    $region44: #{tpu_custom_call.1} parent=1 // pred_region
      %81 = dma.done [#allocation9], 1024
    $region45: #{tpu_custom_call.1} parent=1 // pred_fallthru
      _
    %v83 = vld [vmem:[#allocation2] sm:$0xf]
    %v84 = vld [vmem:[#allocation2 + $0x4] sm:$0xf]
    %v85 = vld [vmem:[#allocation5] sm:$0xf]
    %v86 = vld [vmem:[#allocation5 + $0x4] sm:$0xf]
    %v87 = vld [vmem:[#allocation5 + $0x8] sm:$0xf]
    %v88 = vld [vmem:[#allocation5 + $0xc] sm:$0xf]
    %v89 = vld [vmem:[#allocation5 + $0x10] sm:$0xf]
    %v90 = vld [vmem:[#allocation5 + $0x14] sm:$0xf]
    %v91 = vld [vmem:[#allocation5 + $0x18] sm:$0xf]
    %v92 = vld [vmem:[#allocation5 + $0x1c] sm:$0xf]
    %v93 = vld [vmem:[#allocation5 + $0x20] sm:$0xf]
    %v94 = vld [vmem:[#allocation5 + $0x24] sm:$0xf]
    %v95 = vld [vmem:[#allocation5 + $0x28] sm:$0xf]
    %v96 = vld [vmem:[#allocation5 + $0x2c] sm:$0xf]
    %v97 = vld [vmem:[#allocation5 + $0x30] sm:$0xf]
    %v98 = vld [vmem:[#allocation5 + $0x34] sm:$0xf]
    %v99 = vld [vmem:[#allocation5 + $0x38] sm:$0xf]
    %v100 = vld [vmem:[#allocation5 + $0x3c] sm:$0xf]
    %v101 = vld [vmem:[%s2] sm:$0x1]
    %v103 = vlaneseq
    %v104 = vshrl.u32 %v103, 7
    %v105 = vsub.s32 0, %v104
    %v106 = vrot.slane %v101, %v105
    %v110 = vunpack.c.l.b16 %v83
    %v111 = vunpack.c.l.b16 %v84
    %v112 = vpack.c.b16 %v111, %v110
    %v130 = vunpack.c.l.b16 %v85
    %v131 = vunpack.c.l.b16 %v86
    %v132 = vunpack.c.l.b16 %v87
    %v133 = vunpack.c.l.b16 %v88
    %v134 = vunpack.c.l.b16 %v89
    %v135 = vunpack.c.l.b16 %v90
    %v136 = vunpack.c.l.b16 %v91
    %v137 = vunpack.c.l.b16 %v92
    %v138 = vunpack.c.l.b16 %v93
    %v139 = vunpack.c.l.b16 %v94
    %v140 = vunpack.c.l.b16 %v95
    %v141 = vunpack.c.l.b16 %v96
    %v142 = vunpack.c.l.b16 %v97
    %v143 = vunpack.c.l.b16 %v98
    %v144 = vunpack.c.l.b16 %v99
    %v145 = vunpack.c.l.b16 %v100
    %v146 = vpack.c.b16 %v131, %v130
    %v147 = vpack.c.b16 %v133, %v132
    %v148 = vpack.c.b16 %v135, %v134
    %v149 = vpack.c.b16 %v137, %v136
    %v150 = vpack.c.b16 %v139, %v138
    %v151 = vpack.c.b16 %v141, %v140
    %v152 = vpack.c.b16 %v143, %v142
    %v153 = vpack.c.b16 %v145, %v144
    %162 = vmatprep.subr.bf16.mxu0 0
    %163 = vmatpush1.bf16.msra.mxu0 %v153
    %164 = vmatprep.subr.bf16.mxu0 0
    %165 = vmatpush1.bf16.msra.mxu0 %v152
    %166 = vmatprep.subr.bf16.mxu0 0
    %167 = vmatpush1.bf16.msra.mxu0 %v151
    %168 = vmatprep.subr.bf16.mxu0 0
    %169 = vmatpush1.bf16.msra.mxu0 %v150
    %170 = vmatprep.subr.bf16.mxu0 0
    %171 = vmatpush1.bf16.msra.mxu0 %v149
    %172 = vmatprep.subr.bf16.mxu0 0
    %173 = vmatpush1.bf16.msra.mxu0 %v148
    %174 = vmatprep.subr.bf16.mxu0 0
    %175 = vmatpush1.bf16.msra.mxu0 %v147
    %176 = vmatprep.subr.bf16.mxu0 0
    %177 = vmatpush1.bf16.msra.mxu0 %v146
    %178 = vmatprep.subr.bf16.mxu0 0
    %179 = vmatpush2.bf16.msra.mxu0 0
    %180 = vmatprep.subr.bf16.mxu0 0
    %181 = vmatpush2.bf16.msra.mxu0 0
    %182 = vmatprep.subr.bf16.mxu0 0
    %183 = vmatpush2.bf16.msra.mxu0 0
    %184 = vmatprep.subr.bf16.mxu0 0
    %185 = vmatpush2.bf16.msra.mxu0 0
    %186 = vmatprep.subr.bf16.mxu0 0
    %187 = vmatpush2.bf16.msra.mxu0 0
    %188 = vmatprep.subr.bf16.mxu0 0
    %189 = vmatpush2.bf16.msra.mxu0 0
    %190 = vmatprep.subr.bf16.mxu0 0
    %191 = vmatpush2.bf16.msra.mxu0 0
    %192 = vmatprep.subr.bf16.mxu0 0
    %193 = vmatpush2.bf16.msra.mxu0 0
    %194 = vmatprep.mubr.bf16.mxu0 0
    %195 = vmatmul.mubr.bf16.gmra.mxu0 %v112
    %v196 = vpop.f32.mrf.mxu0
    %v197 = vadd.f32 %v106, %v196
    %v198 = vpop.f32.mrf.mxu0
    %v199 = vpop.f32.mrf.mxu0
    %v200 = vadd.f32 %v106, %v199
    %v201 = vpop.f32.mrf.mxu0
    %202 = vdwg.mxu0
    %v203 = vmul.f32 %v197, 0.5
    %v204 = vmul.f32 %v200, 0.5
    %v205 = vtanh.pop %v203
    %v206 = vtanh.pop %v204
    %v207 = vadd.f32 %v205, 1.0
    %v208 = vadd.f32 %v206, 1.0
    %v209 = vmul.f32 %v207, 0.5
    %v210 = vmul.f32 %v208, 0.5
    %v211 = vpack.c.bf16 %v210, %v209
    %v212 = vld [vmem:[#allocation7] sm:$0xf]
    %v213 = vld [vmem:[#allocation7 + $0x4] sm:$0xf]
    %v214 = vld [vmem:[#allocation7 + $0x8] sm:$0xf]
    %v215 = vld [vmem:[#allocation7 + $0xc] sm:$0xf]
    %v216 = vld [vmem:[#allocation7 + $0x10] sm:$0xf]
    %v217 = vld [vmem:[#allocation7 + $0x14] sm:$0xf]
    %v218 = vld [vmem:[#allocation7 + $0x18] sm:$0xf]
    %v219 = vld [vmem:[#allocation7 + $0x1c] sm:$0xf]
    %v220 = vld [vmem:[#allocation7 + $0x20] sm:$0xf]
    %v221 = vld [vmem:[#allocation7 + $0x24] sm:$0xf]
    %v222 = vld [vmem:[#allocation7 + $0x28] sm:$0xf]
    %v223 = vld [vmem:[#allocation7 + $0x2c] sm:$0xf]
    %v224 = vld [vmem:[#allocation7 + $0x30] sm:$0xf]
    %v225 = vld [vmem:[#allocation7 + $0x34] sm:$0xf]
    %v226 = vld [vmem:[#allocation7 + $0x38] sm:$0xf]
    %v227 = vld [vmem:[#allocation7 + $0x3c] sm:$0xf]
    %v228 = vld [vmem:[%s4] sm:$0x1]
    %v230 = vlaneseq
    %v231 = vshrl.u32 %v230, 7
    %v232 = vsub.s32 0, %v231
    %v233 = vrot.slane %v228, %v232
    %v251 = vunpack.c.l.b16 %v212
    %v252 = vunpack.c.l.b16 %v213
    %v253 = vunpack.c.l.b16 %v214
    %v254 = vunpack.c.l.b16 %v215
    %v255 = vunpack.c.l.b16 %v216
    %v256 = vunpack.c.l.b16 %v217
    %v257 = vunpack.c.l.b16 %v218
    %v258 = vunpack.c.l.b16 %v219
    %v259 = vunpack.c.l.b16 %v220
    %v260 = vunpack.c.l.b16 %v221
    %v261 = vunpack.c.l.b16 %v222
    %v262 = vunpack.c.l.b16 %v223
    %v263 = vunpack.c.l.b16 %v224
    %v264 = vunpack.c.l.b16 %v225
    %v265 = vunpack.c.l.b16 %v226
    %v266 = vunpack.c.l.b16 %v227
    %v267 = vpack.c.b16 %v252, %v251
    %v268 = vpack.c.b16 %v254, %v253
    %v269 = vpack.c.b16 %v256, %v255
    %v270 = vpack.c.b16 %v258, %v257
    %v271 = vpack.c.b16 %v260, %v259
    %v272 = vpack.c.b16 %v262, %v261
    %v273 = vpack.c.b16 %v264, %v263
    %v274 = vpack.c.b16 %v266, %v265
    %283 = vmatprep.subr.bf16.mxu0 0
    %284 = vmatpush1.bf16.msra.mxu0 %v274
    %285 = vmatprep.subr.bf16.mxu0 0
    %286 = vmatpush1.bf16.msra.mxu0 %v273
    %287 = vmatprep.subr.bf16.mxu0 0
    %288 = vmatpush1.bf16.msra.mxu0 %v272
    %289 = vmatprep.subr.bf16.mxu0 0
    %290 = vmatpush1.bf16.msra.mxu0 %v271
    %291 = vmatprep.subr.bf16.mxu0 0
    %292 = vmatpush1.bf16.msra.mxu0 %v270
    %293 = vmatprep.subr.bf16.mxu0 0
    %294 = vmatpush1.bf16.msra.mxu0 %v269
    %295 = vmatprep.subr.bf16.mxu0 0
    %296 = vmatpush1.bf16.msra.mxu0 %v268
    %297 = vmatprep.subr.bf16.mxu0 0
    %298 = vmatpush1.bf16.msra.mxu0 %v267
    %299 = vmatprep.subr.bf16.mxu0 0
    %300 = vmatpush2.bf16.msra.mxu0 0
    %301 = vmatprep.subr.bf16.mxu0 0
    %302 = vmatpush2.bf16.msra.mxu0 0
    %303 = vmatprep.subr.bf16.mxu0 0
    %304 = vmatpush2.bf16.msra.mxu0 0
    %305 = vmatprep.subr.bf16.mxu0 0
    %306 = vmatpush2.bf16.msra.mxu0 0
    %307 = vmatprep.subr.bf16.mxu0 0
    %308 = vmatpush2.bf16.msra.mxu0 0
    %309 = vmatprep.subr.bf16.mxu0 0
    %310 = vmatpush2.bf16.msra.mxu0 0
    %311 = vmatprep.subr.bf16.mxu0 0
    %312 = vmatpush2.bf16.msra.mxu0 0
    %313 = vmatprep.subr.bf16.mxu0 0
    %314 = vmatpush2.bf16.msra.mxu0 0
    %315 = vmatprep.mubr.bf16.mxu0 0
    %316 = vmatmul.mubr.bf16.gmra.mxu0 %v211
    %v317 = vpop.f32.mrf.mxu0
    %v318 = vadd.f32 %v233, %v317
    %v319 = vpop.f32.mrf.mxu0
    %v320 = vpop.f32.mrf.mxu0
    %v321 = vadd.f32 %v233, %v320
    %v322 = vpop.f32.mrf.mxu0
    %323 = vdwg.mxu0
    %v324 = vmul.f32 %v318, 0.5
    %v325 = vmul.f32 %v321, 0.5
    %v326 = vtanh.pop %v324
    %v327 = vtanh.pop %v325
    %v328 = vadd.f32 %v326, 1.0
    %v329 = vadd.f32 %v327, 1.0
    %v330 = vmul.f32 %v328, 0.5
    %v331 = vmul.f32 %v329, 0.5
    %v332 = vpack.c.bf16 %v331, %v330
    %v333 = vld [vmem:[#allocation8] sm:$0xf]
    %v334 = vld [vmem:[#allocation8 + $0x4] sm:$0xf]
    %v335 = vld [vmem:[#allocation8 + $0x8] sm:$0xf]
    %v336 = vld [vmem:[#allocation8 + $0xc] sm:$0xf]
    %v337 = vld [vmem:[#allocation8 + $0x10] sm:$0xf]
    %v338 = vld [vmem:[#allocation8 + $0x14] sm:$0xf]
    %v339 = vld [vmem:[#allocation8 + $0x18] sm:$0xf]
    %v340 = vld [vmem:[#allocation8 + $0x1c] sm:$0xf]
    %v341 = vld [vmem:[#allocation8 + $0x20] sm:$0xf]
    %v342 = vld [vmem:[#allocation8 + $0x24] sm:$0xf]
    %v343 = vld [vmem:[#allocation8 + $0x28] sm:$0xf]
    %v344 = vld [vmem:[#allocation8 + $0x2c] sm:$0xf]
    %v345 = vld [vmem:[#allocation8 + $0x30] sm:$0xf]
    %v346 = vld [vmem:[#allocation8 + $0x34] sm:$0xf]
    %v347 = vld [vmem:[#allocation8 + $0x38] sm:$0xf]
    %v348 = vld [vmem:[#allocation8 + $0x3c] sm:$0xf]
    %v349 = vld [vmem:[%s6] sm:$0x1]
    %v351 = vlaneseq
    %v352 = vshrl.u32 %v351, 7
    %v353 = vsub.s32 0, %v352
    %v354 = vrot.slane %v349, %v353
    %v372 = vunpack.c.l.b16 %v333
    %v373 = vunpack.c.l.b16 %v334
    %v374 = vunpack.c.l.b16 %v335
    %v375 = vunpack.c.l.b16 %v336
    %v376 = vunpack.c.l.b16 %v337
    %v377 = vunpack.c.l.b16 %v338
    %v378 = vunpack.c.l.b16 %v339
    %v379 = vunpack.c.l.b16 %v340
    %v380 = vunpack.c.l.b16 %v341
    %v381 = vunpack.c.l.b16 %v342
    %v382 = vunpack.c.l.b16 %v343
    %v383 = vunpack.c.l.b16 %v344
    %v384 = vunpack.c.l.b16 %v345
    %v385 = vunpack.c.l.b16 %v346
    %v386 = vunpack.c.l.b16 %v347
    %v387 = vunpack.c.l.b16 %v348
    %v388 = vpack.c.b16 %v373, %v372
    %v389 = vpack.c.b16 %v375, %v374
    %v390 = vpack.c.b16 %v377, %v376
    %v391 = vpack.c.b16 %v379, %v378
    %v392 = vpack.c.b16 %v381, %v380
    %v393 = vpack.c.b16 %v383, %v382
    %v394 = vpack.c.b16 %v385, %v384
    %v395 = vpack.c.b16 %v387, %v386
    %404 = vmatprep.subr.bf16.mxu0 0
    %405 = vmatpush1.bf16.msra.mxu0 %v395
    %406 = vmatprep.subr.bf16.mxu0 0
    %407 = vmatpush1.bf16.msra.mxu0 %v394
    %408 = vmatprep.subr.bf16.mxu0 0
    %409 = vmatpush1.bf16.msra.mxu0 %v393
    %410 = vmatprep.subr.bf16.mxu0 0
    %411 = vmatpush1.bf16.msra.mxu0 %v392
    %412 = vmatprep.subr.bf16.mxu0 0
    %413 = vmatpush1.bf16.msra.mxu0 %v391
    %414 = vmatprep.subr.bf16.mxu0 0
    %415 = vmatpush1.bf16.msra.mxu0 %v390
    %416 = vmatprep.subr.bf16.mxu0 0
    %417 = vmatpush1.bf16.msra.mxu0 %v389
    %418 = vmatprep.subr.bf16.mxu0 0
    %419 = vmatpush1.bf16.msra.mxu0 %v388
    %420 = vmatprep.subr.bf16.mxu0 0
    %421 = vmatpush2.bf16.msra.mxu0 0
    %422 = vmatprep.subr.bf16.mxu0 0
    %423 = vmatpush2.bf16.msra.mxu0 0
    %424 = vmatprep.subr.bf16.mxu0 0
    %425 = vmatpush2.bf16.msra.mxu0 0
    %426 = vmatprep.subr.bf16.mxu0 0
    %427 = vmatpush2.bf16.msra.mxu0 0
    %428 = vmatprep.subr.bf16.mxu0 0
    %429 = vmatpush2.bf16.msra.mxu0 0
    %430 = vmatprep.subr.bf16.mxu0 0
    %431 = vmatpush2.bf16.msra.mxu0 0
    %432 = vmatprep.subr.bf16.mxu0 0
    %433 = vmatpush2.bf16.msra.mxu0 0
    %434 = vmatprep.subr.bf16.mxu0 0
    %435 = vmatpush2.bf16.msra.mxu0 0
    %436 = vmatprep.mubr.bf16.mxu0 0
    %437 = vmatmul.mubr.bf16.gmra.mxu0 %v332
    %v438 = vpop.f32.mrf.mxu0
    %v439 = vadd.f32 %v354, %v438
    %v440 = vpop.f32.mrf.mxu0
    %v441 = vpop.f32.mrf.mxu0
    %v442 = vadd.f32 %v354, %v441
    %v443 = vpop.f32.mrf.mxu0
    %444 = vdwg.mxu0
    %445 = vst [vmem:[#allocation10] sm:$0xff] %v439
    %446 = vst [vmem:[#allocation10 + $0x8] sm:$0xff] %v442
    // Predicated region
    $region46: #{tpu_custom_call.1} parent=1 // pred_check
      _
    $region47: #{tpu_custom_call.1} parent=1 // pred_check_branch
      %448 = sbr.rel (0) target = $region49
    $region48: #{tpu_custom_call.1} parent=1 // pred_region
      %s450 = ssub.s32 256, 256
      %451 = vsyncadd [#allocation4], %s450
      %s452 = sshll.u32 [#allocation10], 4
      %s453 = int_to_ptr.vmem [resolvable:$true] %s452
      %458 = dma.vmem_to_hbm [thread:$0]  %s453, 256, %s7, [#allocation4], 128, 128, 8
    $region49: #{tpu_custom_call.1} parent=1 // pred_fallthru
      _
    // Predicated region
    $region50: #{tpu_custom_call.1} parent=1 // pred_check
      _
    $region51: #{tpu_custom_call.1} parent=1 // pred_check_branch
      %460 = sbr.rel (0) target = $region53
    $region52: #{tpu_custom_call.1} parent=1 // pred_region
      %461 = dma.done [#allocation4], 256
    $region53: #{tpu_custom_call.1} parent=1 // pred_fallthru
      _
    %462 = vsyncpa [#allocation3], 1
    %463 = vsyncpa [#allocation6], 1
    %464 = vsyncpa [#allocation9], 1
    %465 = vsyncpa [#allocation4], 1

</llo_original>
